<compile_context>
chip_gen: v7x
topology: tpu7x:2x2x1
jax: 0.10.0
libtpu: 0.0.40
codegen_flags: <defaults>
</compile_context>

<pallas_src>
import functools

import jax
import jax.numpy as jnp
from jax.experimental import pallas as pl
from jax.experimental.pallas import tpu as pltpu

MED_FRQ = [0.3829, 0.452448, 0.637584, 0.377464, 0.585595, 0.479574,
           0.781544, 0.982534, 1.017466, 0.624581, 2.589096, 0.980794,
           0.92034, 0.667984, 1.172291, 0.86224, 0.921714, 2.154782,
           1.187832, 1.178115, 1.848545, 1.428922, 2.849658, 0.771605,
           1.656668, 4.483506, 2.209922, 1.12028, 2.790182, 0.706519,
           3.994768, 2.220004, 0.972934, 1.481525, 5.342475, 0.750738,
           4.040773]
NUM_CLASSES = len(MED_FRQ)   # 37
IGNORE_INDEX = 255


def _ce2d_kernel(logits_ref, targets_ref, weight_ref, out_ref, *, hw):
    """One grid cell = one image x one TP-pixel block.

    logits_ref: (C, TP) classes on sublanes, pixels on lanes.
    targets_ref: (1, TP) int32 (ignore_index=255 matches no class).
    weight_ref: (C, 1) f32 class weights (resident).
    out_ref: (1, 2, 128) per-block partials: row 0 = num, row 1 = den.
    hw: total pixels per image (static); used to mask the ragged tail block.
    """
    x = logits_ref[...].astype(jnp.float32)              # (C, TP)
    c, tp = x.shape
    t = targets_ref[...]                                  # (1, TP) int32
    w = weight_ref[...].astype(jnp.float32)               # (C, 1)

    # Ragged-tail masking (only emitted when H*W is not a multiple of TP):
    # out-of-bounds lanes of the last block carry unspecified DMA data, so
    # force their targets to IGNORE_INDEX and their logits to a finite value.
    if hw % tp != 0:
        j = pl.program_id(1)
        pix = j * tp + jax.lax.broadcasted_iota(jnp.int32, (1, tp), 1)
        valid = pix < hw                                   # (1, TP)
        t = jnp.where(valid, t, IGNORE_INDEX)
        x = jnp.where(valid, x, 0.0)

    # Numerically stable log-sum-exp over the class (sublane) axis.
    m = jnp.max(x, axis=0, keepdims=True)                  # (1, TP)
    xm = x - m                                             # (C, TP)
    lse = jnp.log(jnp.sum(jnp.exp(xm), axis=0, keepdims=True))  # (1, TP)

    # One-hot selection of the target class:
    #   -logp[p, t_p] = lse_p - (x[p, t_p] - m_p) = (lse - xm)[t_p, p]
    # Ignored / out-of-range targets (255) match no class -> contribute 0.
    cls = jax.lax.broadcasted_iota(jnp.int32, (c, tp), 0)
    onehot = cls == t                                      # (C, TP) bool
    num = jnp.sum(jnp.where(onehot, w * (lse - xm), 0.0))  # scalar partial
    den = jnp.sum(jnp.where(onehot, w, 0.0))               # scalar partial

    row = jax.lax.broadcasted_iota(jnp.int32, (2, 128), 0)
    out_ref[...] = jnp.where(row == 0, num, den)[None]     # lane-dense store


@functools.partial(jax.jit, static_argnames=("tile_pixels",))
def cross_entropy_loss2d_new(inputs, targets, weight, *, tile_pixels=32768):
    """inputs: (N, C, H, W) float; targets: (N, H, W) int; weight: (C,) float.

    Returns scalar f32 loss = sum_p w[t_p] * (-logp[p, t_p]) / sum_p w[t_p]
    over pixels with t_p != 255, i.e. NLLLoss2d(weight, size_average=True,
    ignore_index=255) applied to log_softmax(inputs) over the channel dim.
    (If every pixel is ignored, den == 0 and the result is NaN — same
    degenerate behavior as PyTorch.)
    """
    n, c, h, w_ = inputs.shape
    hw = h * w_

    # Free reshapes of NCHW / NHW layouts — no transpose, no extra HBM pass.
    logits = inputs.reshape(n, c, hw)          # dtype passthrough (bf16 stays bf16)
    tgt = targets.reshape(n, 1, hw)
    if tgt.dtype != jnp.int32:
        tgt = tgt.astype(jnp.int32)
    wcol = weight.reshape(c, 1)
    if wcol.dtype != jnp.float32:
        wcol = wcol.astype(jnp.float32)

    # Pixel tile: large (amortize ~0.35us/step), lane-aligned, capped near H*W.
    # No padding: the grid uses cdiv and the kernel masks the ragged tail.
    tp = min(tile_pixels, pl.cdiv(hw, 128) * 128)
    nb = pl.cdiv(hw, tp)

    # v7x megacore balance: prefer an even total block count for tiny inputs.
    if (n * nb) % 2 == 1 and hw > 128:
        tp2 = pl.cdiv(pl.cdiv(hw, nb + 1), 128) * 128
        nb2 = pl.cdiv(hw, tp2)
        if (n * nb2) % 2 == 0:
            tp, nb = tp2, nb2

    grid = (n, nb)
    kernel = functools.partial(_ce2d_kernel, hw=hw)

    parts = pl.pallas_call(
        kernel,
        out_shape=jax.ShapeDtypeStruct((n * nb, 2, 128), jnp.float32),
        grid_spec=pltpu.PrefetchScalarGridSpec(
            num_scalar_prefetch=0,
            grid=grid,
            in_specs=[
                # logits: classes on sublanes, pixels on lanes
                pl.BlockSpec((None, c, tp), lambda i, j: (i, 0, j)),
                # targets: lane-dense int32 row per pixel block
                pl.BlockSpec((None, 1, tp), lambda i, j: (i, 0, j)),
                # class weights: resident (constant index map)
                pl.BlockSpec((c, 1), lambda i, j: (0, 0)),
            ],
            out_specs=pl.BlockSpec((1, 2, 128), lambda i, j: (i * nb + j, 0, 0)),
        ),
        compiler_params=pltpu.CompilerParams(
            dimension_semantics=("parallel", "parallel"),
            vmem_limit_bytes=32 * 1024 * 1024),
    )(logits, tgt, wcol)

    num = jnp.sum(parts[:, 0, 0])
    den = jnp.sum(parts[:, 1, 0])
    return (num / den).astype(jnp.float32)


def _reference(inputs, targets, weight):
    # pure-JAX reference for correctness check
    logp = jax.nn.log_softmax(inputs.astype(jnp.float32), axis=1)  # (N,C,H,W)
    n, c, h, w_ = inputs.shape
    logp = jnp.transpose(logp, (0, 2, 3, 1)).reshape(-1, c)
    t = targets.reshape(-1)
    valid = t != IGNORE_INDEX
    t_safe = jnp.where(valid, t, 0)
    picked = jnp.take_along_axis(logp, t_safe[:, None], axis=1)[:, 0]
    wt = weight[t_safe] * valid.astype(jnp.float32)
    return jnp.sum(-wt * picked) / jnp.sum(wt)


def _make_case(key, n, h, w_):
    k1, k2, k3 = jax.random.split(key, 3)
    inputs = jax.random.normal(k1, (n, NUM_CLASSES, h, w_), dtype=jnp.float32)
    targets = jax.random.randint(k2, (n, h, w_), 0, NUM_CLASSES, dtype=jnp.int32)
    ignore_mask = jax.random.bernoulli(k3, 0.1, (n, h, w_))
    targets = jnp.where(ignore_mask, jnp.int32(IGNORE_INDEX), targets)
    return inputs, targets


if __name__ == "__main__":
    key = jax.random.PRNGKey(0)
    ka, kb = jax.random.split(key)
    weight = jnp.asarray(MED_FRQ, dtype=jnp.float32)

    # Case 1: H*W divisible by the tile (no ragged-tail mask emitted).
    inputs, targets = _make_case(ka, 2, 16, 16)           # (2, 37, 16, 16)
    loss = jax.block_until_ready(cross_entropy_loss2d_new(inputs, targets, weight))
    ref = _reference(inputs, targets, weight)
    assert jnp.allclose(loss, ref, rtol=1e-5, atol=1e-5), (loss, ref)

    # Case 2: ragged pixel count (H*W = 208, tile = 128) exercises the
    # in-kernel tail masking path that replaces the old wrapper jnp.pad.
    inputs2, targets2 = _make_case(kb, 2, 13, 16)          # (2, 37, 13, 16)
    loss2 = jax.block_until_ready(
        cross_entropy_loss2d_new(inputs2, targets2, weight, tile_pixels=128))
    ref2 = _reference(inputs2, targets2, weight)
    assert jnp.allclose(loss2, ref2, rtol=1e-5, atol=1e-5), (loss2, ref2)

    print("KERNEL_OK")
</pallas_src>

<mosaic_0001>
module attributes {stable_mosaic.version = 11 : i64} {
  func.func @_ce2d_kernel(%arg0: i32, %arg1: i32, %arg2: memref<1x37x256xf32, #tpu.memory_space<vmem>>, %arg3: memref<1x1x256xi32, #tpu.memory_space<vmem>>, %arg4: memref<37x1xf32, #tpu.memory_space<vmem>>, %arg5: memref<1x2x128xf32, #tpu.memory_space<vmem>>) attributes {dimension_semantics = [#tpu.dimension_semantics<parallel>, #tpu.dimension_semantics<parallel>], iteration_bounds = array<i64: 2, 1>, scalar_prefetch = 0 : i64, scratch_operands = 0 : i64, tpu.core_type = #tpu.core_type<tc>, window_params = [{transform_indices = @transform_0, window_bounds = array<i64: 1, 37, 256>}, {transform_indices = @transform_1, window_bounds = array<i64: 1, 1, 256>}, {pipeline_mode = #tpu.pipeline_mode<synchronous>, transform_indices = @transform_2, window_bounds = array<i64: 37, 1>}, {transform_indices = @transform_3, window_bounds = array<i64: 1, 2, 128>}]} {
    %c0 = arith.constant 0 : index
    %c0_0 = arith.constant 0 : index
    %c0_1 = arith.constant 0 : index
    %0 = vector.load %arg2[%c0, %c0_0, %c0_1] : memref<1x37x256xf32, #tpu.memory_space<vmem>>, vector<1x37x256xf32>
    %1 = vector.shape_cast %0 : vector<1x37x256xf32> to vector<37x256xf32>
    %c0_2 = arith.constant 0 : index
    %c0_3 = arith.constant 0 : index
    %c0_4 = arith.constant 0 : index
    %2 = vector.load %arg3[%c0_2, %c0_3, %c0_4] : memref<1x1x256xi32, #tpu.memory_space<vmem>>, vector<1x1x256xi32>
    %3 = vector.shape_cast %2 : vector<1x1x256xi32> to vector<1x256xi32>
    %c0_5 = arith.constant 0 : index
    %c0_6 = arith.constant 0 : index
    %4 = vector.load %arg4[%c0_5, %c0_6] : memref<37x1xf32, #tpu.memory_space<vmem>>, vector<37x1xf32>
    %cst = arith.constant dense<0xFF800000> : vector<256xf32>
    %5 = vector.multi_reduction <maximumf>, %1, %cst [0] : vector<37x256xf32> to vector<256xf32>
    %6 = vector.shape_cast %5 : vector<256xf32> to vector<1x256xf32>
    %7 = vector.broadcast %6 : vector<1x256xf32> to vector<37x256xf32>
    %8 = arith.subf %1, %7 : vector<37x256xf32>
    %9 = math.exp %8 : vector<37x256xf32>
    %cst_7 = arith.constant dense<0.000000e+00> : vector<256xf32>
    %10 = vector.multi_reduction <add>, %9, %cst_7 [0] : vector<37x256xf32> to vector<256xf32>
    %11 = vector.shape_cast %10 : vector<256xf32> to vector<1x256xf32>
    %12 = math.log %11 : vector<1x256xf32>
    %13 = tpu.iota {dimensions = array<i32: 0>} : vector<37x256xi32>
    %14 = vector.broadcast %3 : vector<1x256xi32> to vector<37x256xi32>
    %15 = arith.cmpi eq, %13, %14 : vector<37x256xi32>
    %16 = vector.broadcast %12 : vector<1x256xf32> to vector<37x256xf32>
    %17 = arith.subf %16, %8 : vector<37x256xf32>
    %18 = vector.broadcast %4 : vector<37x1xf32> to vector<37x256xf32>
    %19 = arith.mulf %18, %17 : vector<37x256xf32>
    %cst_8 = arith.constant 0.000000e+00 : f32
    %20 = vector.broadcast %cst_8 : f32 to vector<37x256xf32>
    %21 = arith.select %15, %19, %20 : vector<37x256xi1>, vector<37x256xf32>
    %22 = vector.shape_cast %21 : vector<37x256xf32> to vector<1x37x256xf32>
    %cst_9 = arith.constant dense<0.000000e+00> : vector<1xf32>
    %23 = vector.multi_reduction <add>, %22, %cst_9 [1, 2] : vector<1x37x256xf32> to vector<1xf32>
    %24 = vector.shape_cast %23 : vector<1xf32> to vector<1x1x1xf32>
    %25 = vector.extract %24[0, 0, 0] : f32 from vector<1x1x1xf32>
    %cst_10 = arith.constant 0.000000e+00 : f32
    %26 = vector.shape_cast %4 : vector<37x1xf32> to vector<37x1xf32>
    %27 = vector.broadcast %26 : vector<37x1xf32> to vector<37x256xf32>
    %28 = vector.broadcast %cst_10 : f32 to vector<37x256xf32>
    %29 = arith.select %15, %27, %28 : vector<37x256xi1>, vector<37x256xf32>
    %30 = vector.shape_cast %29 : vector<37x256xf32> to vector<1x37x256xf32>
    %cst_11 = arith.constant dense<0.000000e+00> : vector<1xf32>
    %31 = vector.multi_reduction <add>, %30, %cst_11 [1, 2] : vector<1x37x256xf32> to vector<1xf32>
    %32 = vector.shape_cast %31 : vector<1xf32> to vector<1x1x1xf32>
    %33 = vector.extract %32[0, 0, 0] : f32 from vector<1x1x1xf32>
    %34 = tpu.iota {dimensions = array<i32: 0>} : vector<2x128xi32>
    %c0_i32 = arith.constant 0 : i32
    %35 = vector.broadcast %c0_i32 : i32 to vector<2x128xi32>
    %36 = arith.cmpi eq, %34, %35 : vector<2x128xi32>
    %37 = vector.broadcast %25 : f32 to vector<2x128xf32>
    %38 = vector.broadcast %33 : f32 to vector<2x128xf32>
    %39 = arith.select %36, %37, %38 : vector<2x128xi1>, vector<2x128xf32>
    %40 = vector.shape_cast %39 : vector<2x128xf32> to vector<1x2x128xf32>
    %c0_12 = arith.constant 0 : index
    %c0_13 = arith.constant 0 : index
    %c0_14 = arith.constant 0 : index
    %41 = vector.load %arg5[%c0_12, %c0_13, %c0_14] : memref<1x2x128xf32, #tpu.memory_space<vmem>>, vector<1x2x128xf32>
    tpu.vector_store %arg5[%c0_12, %c0_13, %c0_14], %40 {strides = array<i32>} : memref<1x2x128xf32, #tpu.memory_space<vmem>>, vector<1x2x128xf32>,
    return
  }
  func.func @transform_0(%arg0: i32, %arg1: i32) -> (i32, i32, i32) {
    %c0_i32 = arith.constant 0 : i32
    %c0_i32_0 = arith.constant 0 : i32
    return %arg0, %c0_i32, %arg1 : i32, i32, i32
  }
  func.func @transform_1(%arg0: i32, %arg1: i32) -> (i32, i32, i32) {
    %c0_i32 = arith.constant 0 : i32
    %c0_i32_0 = arith.constant 0 : i32
    return %arg0, %c0_i32, %arg1 : i32, i32, i32
  }
  func.func @transform_2(%arg0: i32, %arg1: i32) -> (i32, i32) {
    %c0_i32 = arith.constant 0 : i32
    %c0_i32_0 = arith.constant 0 : i32
    %c0_i32_1 = arith.constant 0 : i32
    return %c0_i32, %c0_i32_0 : i32, i32
  }
  func.func @transform_3(%arg0: i32, %arg1: i32) -> (i32, i32, i32) {
    %c1_i32 = arith.constant 1 : i32
    %0 = arith.muli %arg0, %c1_i32 : i32
    %1 = arith.addi %0, %arg1 : i32
    %c0_i32 = arith.constant 0 : i32
    %c0_i32_0 = arith.constant 0 : i32
    %c0_i32_1 = arith.constant 0 : i32
    return %1, %c0_i32, %c0_i32_0 : i32, i32, i32
  }
}

</mosaic_0001>

<llo_original>
// kernel: cross_entropy_loss2d_new.1
$region0: #{cross_entropy_loss2d_new.1}
  #allocation0 [shape = 'u32[]', space=smem, size = 0x4, offset = 0x4, fixed_abs, tag = 'smem constant byte address 0x4 - core index']
  #allocation1 [shape = 'u32[144,128]{1,0:T(1,128)}', space=vmem, size = 0x12000, scoped, tag = 'internal scratch']
  %s0 = inlined_call_operand.vmem [shape: f32[2,37,256], index: 0, kind: input, shape index: {}]
  %s1 = inlined_call_operand.vmem [shape: s32[2,1,256], index: 1, kind: input, shape index: {}]
  %s2 = inlined_call_operand.vmem [shape: f32[37,1], index: 2, kind: input, shape index: {}]
  %s3 = inlined_call_operand.vmem [shape: f32[2,2,128], index: 3, kind: output, shape index: {}]
  %s4 = sld [smem:[#allocation0]]
  $region45: #{cross_entropy_loss2d_new.1} parent=0
    _
  %s6 = ssub.s32 1, %s4
  %s7 = scalar_select 0, %s6, %s4
  loop: start=0, step=1, limit=4
  $region2: #{cross_entropy_loss2d_new.1} parent=0 // loop_pre_header
    _
  $region3: #{cross_entropy_loss2d_new.1} parent=0 // loop_header
    %s9 = sphi 0, %s13
    %p10 = scmp.ge.s32.totalorder %s9, 4
    %s16 = sphi 0, %s28
    %s17 = sphi 0, %s24
    %s18 = sphi 0, %s16
    %s19 = sphi 0, %s17
    %s20 = sphi 0, %s18
    %s21 = sphi 0, %s19
    %s33 = sphi 0, %s35
    %s36 = sphi 0, %s33
    %s37 = sphi 0, %s36
    %s53 = sphi 0, %s37
    %s61 = sphi 0, %s63
    %s64 = sphi 0, %s61
    %s65 = sphi 0, %s64
    %s81 = sphi 0, %s65
    %s85 = sphi 0, %s85
    %s87 = sphi 0, %s85
    %s88 = sphi 0, %s87
    %s102 = sphi 0, %s88
    %s110 = sphi 0, %s112
    %s113 = sphi 0, %s110
    %s114 = sphi 0, %s113
    %s130 = sphi 0, %s114
  $region4: #{cross_entropy_loss2d_new.1} parent=0 // loop_header_branch
    %12 = sbr.rel (%p10) target = $region8
  $region5: #{cross_entropy_loss2d_new.1} parent=0 // loop_body
    %s14 = ssub.s32 %s9, 1
    %s15 = ssub.s32 %s9, 2
    %s22 = sadd.s32 1, %s17
    %p23 = scmp.ge.s32.totalorder %s22, 1
    %s24 = scalar_select %p23, 0, %s22
    %s25 = sadd.s32 1, %s16
    %s26 = scalar_select %p23, %s25, %s16
    %p27 = scmp.ge.s32.totalorder %s26, 2
    %s28 = scalar_select %p27, 0, %s26
    %s29 = ssub.s32 %s16, %s28
    %s30 = ssub.s32 %s17, %s24
    %s31 = sor.u32 %s29, %s30
    %p32 = scmp.eq.s32.totalorder %s31, 0
    %s34 = sadd.s32 %s33, 1
    %s35 = scalar_select %p32, %s33, %s34
    %p38 = pneg %p32
    %p39 = scmp.eq.s32.totalorder %s9, 1
    %p40 = por %p38, %p39
    %p41 = scmp.ne.s32.totalorder %s33, %s36
    %p42 = scmp.eq.s32.totalorder %s9, 0
    %p43 = por %p41, %p42
    %p44 = scmp.ne.s32.totalorder %s33, %s36
    %p45 = scmp.eq.s32.totalorder %s14, 1
    %p46 = por %p44, %p45
    %p47 = scmp.ne.s32.totalorder %s36, %s37
    %p48 = scmp.eq.s32.totalorder %s14, 0
    %p49 = por %p47, %p48
    %p50 = scmp.ne.s32.totalorder %s36, %s37
    %p51 = scmp.eq.s32.totalorder %s15, 1
    %p52 = por %p50, %p51
    %p54 = scmp.ne.s32.totalorder %s37, %s53
    %p55 = scmp.eq.s32.totalorder %s15, 0
    %p56 = por %p54, %p55
    %s57 = ssub.s32 %s16, %s28
    %s58 = ssub.s32 %s17, %s24
    %s59 = sor.u32 %s57, %s58
    %p60 = scmp.eq.s32.totalorder %s59, 0
    %s62 = sadd.s32 %s61, 1
    %s63 = scalar_select %p60, %s61, %s62
    %p66 = pneg %p60
    %p67 = scmp.eq.s32.totalorder %s9, 1
    %p68 = por %p66, %p67
    %p69 = scmp.ne.s32.totalorder %s61, %s64
    %p70 = scmp.eq.s32.totalorder %s9, 0
    %p71 = por %p69, %p70
    %p72 = scmp.ne.s32.totalorder %s61, %s64
    %p73 = scmp.eq.s32.totalorder %s14, 1
    %p74 = por %p72, %p73
    %p75 = scmp.ne.s32.totalorder %s64, %s65
    %p76 = scmp.eq.s32.totalorder %s14, 0
    %p77 = por %p75, %p76
    %p78 = scmp.ne.s32.totalorder %s64, %s65
    %p79 = scmp.eq.s32.totalorder %s15, 1
    %p80 = por %p78, %p79
    %p82 = scmp.ne.s32.totalorder %s65, %s81
    %p83 = scmp.eq.s32.totalorder %s15, 0
    %p84 = por %p82, %p83
    %s86 = sadd.s32 %s85, 1
    %p89 = scmp.eq.s32.totalorder %s9, 1
    %p90 = scmp.ne.s32.totalorder %s85, %s87
    %p91 = scmp.eq.s32.totalorder %s9, 0
    %p92 = por %p90, %p91
    %p93 = scmp.ne.s32.totalorder %s85, %s87
    %p94 = scmp.eq.s32.totalorder %s14, 1
    %p95 = por %p93, %p94
    %p96 = scmp.ne.s32.totalorder %s87, %s88
    %p97 = scmp.eq.s32.totalorder %s14, 0
    %p98 = por %p96, %p97
    %p99 = scmp.ne.s32.totalorder %s87, %s88
    %p100 = scmp.eq.s32.totalorder %s15, 1
    %p101 = por %p99, %p100
    %p103 = scmp.ne.s32.totalorder %s88, %s102
    %p104 = scmp.eq.s32.totalorder %s15, 0
    %p105 = por %p103, %p104
    %s106 = sadd.s32 %s16, %s17
    %s107 = sadd.s32 %s28, %s24
    %s108 = ssub.s32 %s106, %s107
    %p109 = scmp.eq.s32.totalorder %s108, 0
    %s111 = sadd.s32 %s110, 1
    %s112 = scalar_select %p109, %s110, %s111
    %p115 = pneg %p109
    %p116 = scmp.eq.s32.totalorder %s9, 1
    %p117 = por %p115, %p116
    %p118 = scmp.ne.s32.totalorder %s110, %s113
    %p119 = scmp.eq.s32.totalorder %s9, 0
    %p120 = por %p118, %p119
    %p121 = scmp.ne.s32.totalorder %s110, %s113
    %p122 = scmp.eq.s32.totalorder %s14, 1
    %p123 = por %p121, %p122
    %p124 = scmp.ne.s32.totalorder %s113, %s114
    %p125 = scmp.eq.s32.totalorder %s14, 0
    %p126 = por %p124, %p125
    %p127 = scmp.ne.s32.totalorder %s113, %s114
    %p128 = scmp.eq.s32.totalorder %s15, 1
    %p129 = por %p127, %p128
    %p131 = scmp.ne.s32.totalorder %s114, %s130
    %p132 = scmp.eq.s32.totalorder %s15, 0
    %p133 = por %p131, %p132
    %p134 = scmp.le.s32.totalorder 1, %s9
    %p135 = scmp.lt.s32.totalorder %s9, 3
    %p136 = pnand %p134, %p135
    %p137 = pneg %p136
    // Predicated region
    $region9: #{cross_entropy_loss2d_new.1} parent=5 // pred_check
      _
    $region10: #{cross_entropy_loss2d_new.1} parent=5 // pred_check_branch
      %139 = sbr.rel (%p136) target = $region12
    $region11: #{cross_entropy_loss2d_new.1} parent=5 // pred_region
      %s140 = ssub.s32 %s9, 1
      // Predicated region
      $region13: #{cross_entropy_loss2d_new.1} parent=11 // pred_check
        %p141 = pneg %p98
      $region14: #{cross_entropy_loss2d_new.1} parent=11 // pred_check_branch
        %143 = sbr.rel (%p141) target = $region16
      $region15: #{cross_entropy_loss2d_new.1} parent=11 // pred_region
        _
      $region16: #{cross_entropy_loss2d_new.1} parent=11 // pred_fallthru
        _
    $region12: #{cross_entropy_loss2d_new.1} parent=5 // pred_fallthru
      _
    %p144 = scmp.lt.s32.totalorder %s9, 2
    // Predicated region
    $region17: #{cross_entropy_loss2d_new.1} parent=5 // pred_check
      %p145 = pneg %p144
    $region18: #{cross_entropy_loss2d_new.1} parent=5 // pred_check_branch
      %147 = sbr.rel (%p145) target = $region20
    $region19: #{cross_entropy_loss2d_new.1} parent=5 // pred_region
      // Predicated region
      $region21: #{cross_entropy_loss2d_new.1} parent=19 // pred_check
        %p148 = pneg %p43
      $region22: #{cross_entropy_loss2d_new.1} parent=19 // pred_check_branch
        %150 = sbr.rel (%p148) target = $region24
      $region23: #{cross_entropy_loss2d_new.1} parent=19 // pred_region
        %s151 = smul.u32 2, %s17
        %p152 = scmp.lt.s32.totalorder %s16, 1
        %s153 = scalar_select %p152, %s16, 1
        %p154 = scmp.lt.s32.totalorder %s151, 1
        %s155 = scalar_select %p154, %s151, 1
        %s156 = smul.addr %s153, 10
        %s157 = sadd.s32 %s155, %s156
        %s158 = smul.addr %s157, 8
        %s159 = scalar_lea.vmem %s0, %s158
        %s160 = smul.u32 2, %s17
      $region24: #{cross_entropy_loss2d_new.1} parent=19 // pred_fallthru
        _
      // Predicated region
      $region25: #{cross_entropy_loss2d_new.1} parent=19 // pred_check
        %p161 = pneg %p71
      $region26: #{cross_entropy_loss2d_new.1} parent=19 // pred_check_branch
        %163 = sbr.rel (%p161) target = $region28
      $region27: #{cross_entropy_loss2d_new.1} parent=19 // pred_region
        %s164 = smul.u32 2, %s17
        %p165 = scmp.lt.s32.totalorder %s16, 1
        %s166 = scalar_select %p165, %s16, 1
        %p167 = scmp.lt.s32.totalorder %s164, 1
        %s168 = scalar_select %p167, %s164, 1
        %s169 = smul.addr %s166, 2
        %s170 = sadd.s32 %s168, %s169
        %s171 = scalar_lea.vmem %s1, %s170
        %s172 = smul.u32 2, %s17
      $region28: #{cross_entropy_loss2d_new.1} parent=19 // pred_fallthru
        _
    $region20: #{cross_entropy_loss2d_new.1} parent=5 // pred_fallthru
      _
    %p173 = scmp.le.s32.totalorder 1, %s9
    %p174 = scmp.lt.s32.totalorder %s9, 3
    %p175 = pnand %p173, %p174
    %p176 = pneg %p175
    // Predicated region
    $region29: #{cross_entropy_loss2d_new.1} parent=5 // pred_check
      _
    $region30: #{cross_entropy_loss2d_new.1} parent=5 // pred_check_branch
      %178 = sbr.rel (%p175) target = $region32
    $region31: #{cross_entropy_loss2d_new.1} parent=5 // pred_region
      %s179 = ssub.s32 %s9, 1
      %s180 = smul.u32 2, %s19
      %p181 = scmp.lt.s32.totalorder %s18, 1
      %s182 = scalar_select %p181, %s18, 1
      %p183 = scmp.lt.s32.totalorder %s180, 1
      %s184 = scalar_select %p183, %s180, 1
      %s185 = smul.addr %s182, 10
      %s186 = sadd.s32 %s184, %s185
      %s187 = smul.addr %s186, 8
      %s188 = scalar_lea.vmem %s0, %s187
      %p189 = pneg %p49
      %p190 = pneg %p46
      %s191 = smul.u32 2, %s19
      %p192 = scmp.lt.s32.totalorder %s18, 1
      %s193 = scalar_select %p192, %s18, 1
      %p194 = scmp.lt.s32.totalorder %s191, 1
      %s195 = scalar_select %p194, %s191, 1
      %s196 = smul.addr %s193, 2
      %s197 = sadd.s32 %s195, %s196
      %s198 = scalar_lea.vmem %s1, %s197
      %p199 = pneg %p77
      %p200 = pneg %p74
      %p201 = pneg %p98
      %p202 = pneg %p95
      %p203 = pneg %p126
      %p204 = pneg %p123
      %s205 = sadd.s32 %s18, %s19
      %p206 = scmp.lt.s32.totalorder %s205, 1
      %s207 = scalar_select %p206, %s205, 1
      %s208 = smul.addr %s207, 2
      %s209 = scalar_lea.vmem %s3, %s208
      %s210 = smul.u32 2, %s19
      %p211 = scmp.lt.s32.totalorder %s18, 1
      %s212 = scalar_select %p211, %s18, 1
      %p213 = scmp.lt.s32.totalorder %s210, 1
      %s214 = scalar_select %p213, %s210, 1
      %s215 = smul.addr %s212, 10
      %s216 = sadd.s32 %s214, %s215
      %s217 = smul.addr %s216, 8
      %s218 = scalar_lea.vmem %s0, %s217
      %s219 = smul.u32 2, %s19
      %s220 = smul.u32 2, %s19
      %p221 = scmp.lt.s32.totalorder %s18, 1
      %s222 = scalar_select %p221, %s18, 1
      %p223 = scmp.lt.s32.totalorder %s220, 1
      %s224 = scalar_select %p223, %s220, 1
      %s225 = smul.addr %s222, 2
      %s226 = sadd.s32 %s224, %s225
      %s227 = scalar_lea.vmem %s1, %s226
      %s228 = smul.u32 2, %s19
      %s229 = sadd.s32 %s18, %s19
      %p230 = scmp.lt.s32.totalorder %s229, 1
      %s231 = scalar_select %p230, %s229, 1
      %s232 = smul.addr %s231, 2
      %s233 = scalar_lea.vmem %s3, %s232
      %s234 = sadd.s32 %s18, %s19
      %v235 = vld [vmem:[%s218] sm:$0xff]
      %v236 = vld [vmem:[%s218 + $0x8] sm:$0xff]
      %v237 = vld [vmem:[%s218 + $0x10] sm:$0xff]
      %v238 = vld [vmem:[%s218 + $0x18] sm:$0xff]
      %v239 = vld [vmem:[%s218 + $0x20] sm:$0xff]
      %v240 = vld [vmem:[%s218 + $0x28] sm:$0xff]
      %v241 = vld [vmem:[%s218 + $0x30] sm:$0xff]
      %v242 = vld [vmem:[%s218 + $0x38] sm:$0xff]
      %v243 = vld [vmem:[%s218 + $0x40] sm:$0x1f]
      %v244 = vld [vmem:[%s218 + $0x48] sm:$0x1f]
      %v245 = vld [vmem:[%s227] sm:$0x3]
      %v246 = vld [vmem:[%s2] sm:$0xff]
      %v247 = vld [vmem:[%s2 + $0x8] sm:$0xff]
      %v248 = vld [vmem:[%s2 + $0x10] sm:$0xff]
      %v249 = vld [vmem:[%s2 + $0x18] sm:$0xff]
      %v250 = vld [vmem:[%s2 + $0x20] sm:$0x1f]
      %v251 = vmax.f32 %v235, %v239
      %v252 = vmax.f32 %v237, %v241
      %vm253 = vcmask 1044480
      %v254 = vsel %vm253, %v243, -inf
      %v255 = vmax.f32 %v251, %v254
      %v256 = vmax.f32 %v255, %v252
      %v257 = vrot.slane %v256, 4
      %v258 = vmax.f32 %v256, %v257
      %v259 = vrot.slane %v258, 2
      %v260 = vmax.f32 %v258, %v259
      %v261 = vrot.slane %v260, 1
      %v262 = vmax.f32 %v260, %v261
      %v263 = vmax.f32 %v236, %v240
      %v264 = vmax.f32 %v238, %v242
      %v265 = vsel %vm253, %v244, -inf
      %v266 = vmax.f32 %v263, %v265
      %v267 = vmax.f32 %v266, %v264
      %v268 = vrot.slane %v267, 4
      %v269 = vmax.f32 %v267, %v268
      %v270 = vrot.slane %v269, 2
      %v271 = vmax.f32 %v269, %v270
      %v272 = vrot.slane %v271, 1
      %v273 = vmax.f32 %v271, %v272
      %v274 = vsub.f32 %v235, %v262
      %v275 = vsub.f32 %v236, %v273
      %v276 = vsub.f32 %v237, %v262
      %v277 = vsub.f32 %v238, %v273
      %v278 = vsub.f32 %v239, %v262
      %v279 = vsub.f32 %v240, %v273
      %v280 = vsub.f32 %v241, %v262
      %v281 = vsub.f32 %v242, %v273
      %v282 = vsub.f32 %v243, %v262
      %v283 = vsub.f32 %v244, %v273
      %v284 = vmul.f32 %v274, 1.442695
      %v285 = vpow.pop %v284
      %v286 = vmul.f32 %v275, 1.442695
      %v287 = vpow.pop %v286
      %v288 = vmul.f32 %v276, 1.442695
      %v289 = vpow.pop %v288
      %v290 = vmul.f32 %v277, 1.442695
      %v291 = vpow.pop %v290
      %v292 = vmul.f32 %v278, 1.442695
      %v293 = vpow.pop %v292
      %v294 = vmul.f32 %v279, 1.442695
      %v295 = vpow.pop %v294
      %v296 = vmul.f32 %v280, 1.442695
      %v297 = vpow.pop %v296
      %v298 = vmul.f32 %v281, 1.442695
      %v299 = vpow.pop %v298
      %v300 = vmul.f32 %v282, 1.442695
      %v301 = vpow.pop %v300
      %v302 = vmul.f32 %v283, 1.442695
      %v303 = vpow.pop %v302
      %v304 = vadd.f32 %v285, %v289
      %v305 = vadd.f32 %v304, %v293
      %v306 = vadd.f32 %v305, %v297
      %v307 = vsel %vm253, %v301, 0.0
      %v308 = vadd.f32 %v306, %v307
      %v309 = vrot.slane %v308, 4
      %v310 = vadd.f32 %v308, %v309
      %v311 = vrot.slane %v310, 2
      %v312 = vadd.f32 %v310, %v311
      %v313 = vrot.slane %v312, 1
      %v314 = vadd.f32 %v312, %v313
      %v315 = vadd.f32 %v287, %v291
      %v316 = vadd.f32 %v315, %v295
      %v317 = vadd.f32 %v316, %v299
      %v318 = vsel %vm253, %v303, 0.0
      %v319 = vadd.f32 %v317, %v318
      %v320 = vrot.slane %v319, 4
      %v321 = vadd.f32 %v319, %v320
      %v322 = vrot.slane %v321, 2
      %v323 = vadd.f32 %v321, %v322
      %v324 = vrot.slane %v323, 1
      %v325 = vadd.f32 %v323, %v324
      %v326 = vlog2.pop %v314
      %v327 = vmul.f32 %v326, 0.6931472
      %v328 = vlog2.pop %v325
      %v329 = vmul.f32 %v328, 0.6931472
      %v330 = vlaneseq
      %v331 = vshrl.u32 %v330, 7
      %v332 = vadd.s32 %v331, 8
      %v333 = vadd.s32 %v331, 16
      %v334 = vadd.s32 %v331, 24
      %v335 = vadd.s32 %v331, 32
      %v336 = vlaneseq
      %v337 = vshrl.u32 %v336, 7
      %v338 = vsub.s32 0, %v337
      %v339 = vrot.slane %v245, %v338
      %v340 = vlaneseq
      %v341 = vshrl.u32 %v340, 7
      %v342 = vsub.s32 1, %v341
      %v343 = vrot.slane %v245, %v342
      %vm344 = vcmp.eq.s32.totalorder %v331, %v339
      %vm345 = vcmp.eq.s32.totalorder %v331, %v343
      %vm346 = vcmp.eq.s32.totalorder %v332, %v339
      %vm347 = vcmp.eq.s32.totalorder %v332, %v343
      %vm348 = vcmp.eq.s32.totalorder %v333, %v339
      %vm349 = vcmp.eq.s32.totalorder %v333, %v343
      %vm350 = vcmp.eq.s32.totalorder %v334, %v339
      %vm351 = vcmp.eq.s32.totalorder %v334, %v343
      %vm352 = vcmp.eq.s32.totalorder %v335, %v339
      %vm353 = vcmp.eq.s32.totalorder %v335, %v343
      %v354 = vsub.f32 %v327, %v274
      %v355 = vsub.f32 %v329, %v275
      %v356 = vsub.f32 %v327, %v276
      %v357 = vsub.f32 %v329, %v277
      %v358 = vsub.f32 %v327, %v278
      %v359 = vsub.f32 %v329, %v279
      %v360 = vsub.f32 %v327, %v280
      %v361 = vsub.f32 %v329, %v281
      %v362 = vsub.f32 %v327, %v282
      %v363 = vsub.f32 %v329, %v283
      %365 = vset.pattern.permute.xlu0 0
      %366 = vperm.xlu0 %365, %v246
      %v367 = vpop.permute.xlu0 %366
      %370 = vset.pattern.permute.xlu0 0
      %371 = vperm.xlu0 %370, %v247
      %v372 = vpop.permute.xlu0 %371
      %375 = vset.pattern.permute.xlu0 0
      %376 = vperm.xlu0 %375, %v248
      %v377 = vpop.permute.xlu0 %376
      %380 = vset.pattern.permute.xlu0 0
      %381 = vperm.xlu0 %380, %v249
      %v382 = vpop.permute.xlu0 %381
      %385 = vset.pattern.permute.xlu0 0
      %386 = vperm.xlu0 %385, %v250
      %v387 = vpop.permute.xlu0 %386
      %v389 = vmul.f32 %v367, %v354
      %v390 = vmul.f32 %v367, %v355
      %v391 = vmul.f32 %v372, %v356
      %v392 = vmul.f32 %v372, %v357
      %v393 = vmul.f32 %v377, %v358
      %v394 = vmul.f32 %v377, %v359
      %v395 = vmul.f32 %v382, %v360
      %v396 = vmul.f32 %v382, %v361
      %v397 = vmul.f32 %v387, %v362
      %v398 = vmul.f32 %v387, %v363
      %v399 = vsel %vm344, %v389, 0.0
      %v400 = vsel %vm345, %v390, 0.0
      %v401 = vsel %vm346, %v391, 0.0
      %v402 = vsel %vm347, %v392, 0.0
      %v403 = vsel %vm348, %v393, 0.0
      %v404 = vsel %vm349, %v394, 0.0
      %v405 = vsel %vm350, %v395, 0.0
      %v406 = vsel %vm351, %v396, 0.0
      %v407 = vsel %vm352, %v397, 0.0
      %v408 = vsel %vm353, %v398, 0.0
      %v409 = vadd.f32 %v399, %v400
      %v410 = vadd.f32 %v409, %v401
      %v411 = vadd.f32 %v410, %v402
      %v412 = vadd.f32 %v411, %v403
      %v413 = vadd.f32 %v412, %v404
      %v414 = vadd.f32 %v413, %v405
      %v415 = vadd.f32 %v414, %v406
      %v416 = vsel %vm253, %v407, 0.0
      %v417 = vadd.f32 %v415, %v416
      %v418 = vsel %vm253, %v408, 0.0
      %v419 = vadd.f32 %v417, %v418
      %420 = vadd.xlane.f32.xlu0 %v419
      %v421 = vpop.xlane.xlu0 %420
      %v422 = vrot.slane %v421, 4
      %v423 = vadd.f32 %v421, %v422
      %v424 = vrot.slane %v423, 2
      %v425 = vadd.f32 %v423, %v424
      %v426 = vrot.slane %v425, 1
      %v427 = vadd.f32 %v425, %v426
      %s428 = vtos %v427
      %v429 = vsel %vm344, %v367, 0.0
      %v430 = vsel %vm345, %v367, 0.0
      %v431 = vsel %vm346, %v372, 0.0
      %v432 = vsel %vm347, %v372, 0.0
      %v433 = vsel %vm348, %v377, 0.0
      %v434 = vsel %vm349, %v377, 0.0
      %v435 = vsel %vm350, %v382, 0.0
      %v436 = vsel %vm351, %v382, 0.0
      %v437 = vsel %vm352, %v387, 0.0
      %v438 = vsel %vm353, %v387, 0.0
      %v439 = vadd.f32 %v429, %v430
      %v440 = vadd.f32 %v439, %v431
      %v441 = vadd.f32 %v440, %v432
      %v442 = vadd.f32 %v441, %v433
      %v443 = vadd.f32 %v442, %v434
      %v444 = vadd.f32 %v443, %v435
      %v445 = vadd.f32 %v444, %v436
      %v446 = vsel %vm253, %v437, 0.0
      %v447 = vadd.f32 %v445, %v446
      %v448 = vsel %vm253, %v438, 0.0
      %v449 = vadd.f32 %v447, %v448
      %450 = vadd.xlane.f32.xlu0 %v449
      %v451 = vpop.xlane.xlu0 %450
      %v452 = vrot.slane %v451, 4
      %v453 = vadd.f32 %v451, %v452
      %v454 = vrot.slane %v453, 2
      %v455 = vadd.f32 %v453, %v454
      %v456 = vrot.slane %v455, 1
      %v457 = vadd.f32 %v455, %v456
      %s458 = vtos %v457
      %vm459 = vcmp.eq.s32.totalorder %v331, 0
      %v460 = vstv %s428
      %v461 = vstv %s458
      %v462 = vsel %vm459, %v460, %v461
      %463 = vst [vmem:[%s233] sm:$0x3] %v462
      %s464 = sadd.s32 %s18, %s19
      %p465 = scmp.lt.s32.totalorder %s464, 1
      %s466 = scalar_select %p465, %s464, 1
      %s467 = smul.addr %s466, 2
      %s468 = scalar_lea.vmem %s3, %s467
      // Predicated region
      $region33: #{cross_entropy_loss2d_new.1} parent=31 // pred_check
        %p469 = pneg %p123
      $region34: #{cross_entropy_loss2d_new.1} parent=31 // pred_check_branch
        %471 = sbr.rel (%p469) target = $region36
      $region35: #{cross_entropy_loss2d_new.1} parent=31 // pred_region
        %s472 = sadd.s32 %s18, %s19
      $region36: #{cross_entropy_loss2d_new.1} parent=31 // pred_fallthru
        _
    $region32: #{cross_entropy_loss2d_new.1} parent=5 // pred_fallthru
      _
    %p473 = scmp.le.s32.totalorder 2, %s9
    // Predicated region
    $region37: #{cross_entropy_loss2d_new.1} parent=5 // pred_check
      %p474 = pneg %p473
    $region38: #{cross_entropy_loss2d_new.1} parent=5 // pred_check_branch
      %476 = sbr.rel (%p474) target = $region40
    $region39: #{cross_entropy_loss2d_new.1} parent=5 // pred_region
      %s477 = ssub.s32 %s9, 2
      // Predicated region
      $region41: #{cross_entropy_loss2d_new.1} parent=39 // pred_check
        %p478 = pneg %p129
      $region42: #{cross_entropy_loss2d_new.1} parent=39 // pred_check_branch
        %480 = sbr.rel (%p478) target = $region44
      $region43: #{cross_entropy_loss2d_new.1} parent=39 // pred_region
        %s481 = sadd.s32 %s20, %s21
        %p482 = scmp.lt.s32.totalorder %s481, 1
        %s483 = scalar_select %p482, %s481, 1
        %s484 = smul.addr %s483, 2
        %s485 = scalar_lea.vmem %s3, %s484
      $region44: #{cross_entropy_loss2d_new.1} parent=39 // pred_fallthru
        _
    $region40: #{cross_entropy_loss2d_new.1} parent=5 // pred_fallthru
      _
  $region6: #{cross_entropy_loss2d_new.1} parent=0 // loop_footer
    %s13 = sadd.s32 1, %s9
  $region7: #{cross_entropy_loss2d_new.1} parent=0 // loop_footer_branch
    %8 = sbr.rel target = $region3
  $region8: #{cross_entropy_loss2d_new.1} parent=0 // loop_exit
    _

</llo_original>
